<compile_context>
chip_gen: v7x
topology: tpu7x:2x2x1
jax: 0.10.0
libtpu: 0.0.40
codegen_flags: <defaults>
</compile_context>

<pallas_src>
import math

import jax
import jax.numpy as jnp
from jax import lax
from jax.experimental import pallas as pl
from jax.experimental.pallas import tpu as pltpu


def _make_liner_kernel(reuse_kr):
    def kernel(a_ref, b_ref, c_ref, o_ref, kr_ref):
        # a_ref: (TI, R)   b_ref: (TJ, R)   c_ref: (K, R)
        # o_ref: (TI, TJ*K)   kr_ref (VMEM scratch): (TJ*K, R)
        def build_kr():
            b = b_ref[...]                        # (TJ, R)
            c = c_ref[...]                        # (K, R)
            tj, r = b.shape
            k = c.shape[0]
            kr = b[:, None, :] * c[None, :, :]    # (TJ, K, R) -- VPU elementwise
            kr_ref[...] = kr.reshape(tj * k, r)

        if reuse_kr:
            # I is the inner *sequential* ("arbitrary") axis: build KR on the first
            # I step of each J tile only and reuse it for every subsequent I step.
            pl.when(pl.program_id(1) == 0)(build_kr)
        else:
            # J grid too small to feed both v7x TensorCores: rebuild KR every step so
            # the I axis has no cross-iteration dependence and can be "parallel".
            build_kr()

        # OUT(TI, TJ*K) = A(TI, R) @ KR(TJ*K, R)^T : contract the shared last axis of
        # both operands directly on the MXU (no transpose copy of KR).
        o_ref[...] = lax.dot_general(
            a_ref[...], kr_ref[...],
            dimension_numbers=(((1,), (1,)), ((), ())),
            preferred_element_type=jnp.float32,
        ).astype(o_ref.dtype)

    return kernel


def _vmem_capacity_bytes():
    try:
        return int(pltpu.get_tpu_info().vmem_capacity_bytes)
    except Exception:
        return 64 << 20  # conservative (v7x-sized) fallback


def _workset_bytes(ti, tj, K, R):
    tjk = tj * K
    # double-buffered pipeline copies of every BlockSpec operand + the KR scratch (f32)
    return 4 * (2 * (ti * R + tj * R + K * R + ti * tjk) + tjk * R)


def _choose_tiles(I, J, K, R, vmem_cap):
    if vmem_cap >= (96 << 20):      # v5e / v6e: 128 MiB physical VMEM
        ti_cap, lane_cap = 512, 8192
    else:                           # v7x: 64 MiB physical VMEM
        ti_cap, lane_cap = 256, 4096
    budget = int(0.45 * vmem_cap)

    # I tile: multiple of 8 under a cdiv grid, or the whole (small) dim.
    ti = I if I <= ti_cap else ti_cap

    # J tile: take the whole flat J*K row if it fits (block == full dim waives the
    # 128-divisibility rule); otherwise pick TJ with TJ % 8 == 0 and (TJ*K) % 128 == 0
    # so output stores stay lane-dense (unmasked vst).
    if J * K <= lane_cap:
        tj = J
        step = None
    else:
        need = 128 // math.gcd(K, 128)
        step = 8 * need // math.gcd(8, need)             # lcm(8, 128 // gcd(K, 128))
        tj = max(step, (lane_cap // (K * step)) * step)
        tj = min(tj, ((J + step - 1) // step) * step)    # no point exceeding ceil(J)

    # If the estimate blows the per-generation budget, shrink tiles (never clamp the
    # VMEM limit below the working set).
    for _ in range(64):
        if _workset_bytes(ti, tj, K, R) <= budget:
            break
        if ti > 8:
            ti = max(8, ((ti // 2) // 8) * 8)
        elif step is not None and tj > step:
            tj = max(step, ((tj // 2) // step) * step)
        else:
            break
    return ti, tj


def liner_forward(A, B, C):
    I, R = A.shape
    J, _ = B.shape
    K, _ = C.shape

    vmem_cap = _vmem_capacity_bytes()
    TI, TJ = _choose_tiles(I, J, K, R, vmem_cap)
    TJK = TJ * K
    gi = pl.cdiv(I, TI)
    gj = pl.cdiv(J, TJ)

    # KR reuse across I is only valid while I stays the inner sequential axis; when the
    # J grid cannot feed two TensorCores (v7x) and there is real I parallelism, drop the
    # reuse so both grid axes can be marked "parallel".
    reuse_kr = (gj >= 2) or (gi == 1)
    semantics = ("parallel", "arbitrary") if reuse_kr else ("parallel", "parallel")

    vmem_limit = _workset_bytes(TI, TJ, K, R) + (2 << 20)
    vmem_limit = int(min(max(vmem_limit, 8 << 20), int(0.9 * vmem_cap)))

    cost = pl.CostEstimate(
        flops=2 * I * J * K * R + J * K * R,
        transcendentals=0,
        bytes_accessed=4 * (I * R + J * R + K * R + I * J * K),
    )

    out_flat = pl.pallas_call(
        _make_liner_kernel(reuse_kr),
        out_shape=jax.ShapeDtypeStruct((I, J * K), jnp.float32),
        grid_spec=pltpu.PrefetchScalarGridSpec(
            num_scalar_prefetch=0,
            grid=(gj, gi),  # J tiles outer, I tiles inner (KR reuse across I)
            in_specs=[
                pl.BlockSpec((TI, R), lambda j, i: (i, 0)),   # A
                pl.BlockSpec((TJ, R), lambda j, i: (j, 0)),   # B
                pl.BlockSpec((K, R), lambda j, i: (0, 0)),    # C (whole, grid-invariant)
            ],
            out_specs=pl.BlockSpec((TI, TJK), lambda j, i: (i, j)),
            scratch_shapes=[pltpu.VMEM((TJK, R), jnp.float32)],
        ),
        compiler_params=pltpu.CompilerParams(
            dimension_semantics=semantics,
            vmem_limit_bytes=vmem_limit,
        ),
        cost_estimate=cost,
    )(A, B, C)

    # Row-major (I, J*K) -> (I, J, K) is a free, contiguous reshape outside the kernel.
    return out_flat.reshape(I, J, K)


if __name__ == "__main__":
    # Deterministic parameter init (torch.randn equivalent): standard normal.
    I, J, K, R = 8, 16, 32, 16
    key = jax.random.PRNGKey(0)
    kA, kB, kC = jax.random.split(key, 3)
    A = jax.random.normal(kA, (I, R), dtype=jnp.float32)
    B = jax.random.normal(kB, (J, R), dtype=jnp.float32)
    C = jax.random.normal(kC, (K, R), dtype=jnp.float32)

    X = liner_forward(A, B, C)
    X = jax.block_until_ready(X)

    # Correctness check against the reference einsum.
    X_ref = jnp.einsum('ir,jr,kr->ijk', A, B, C)
    assert X.shape == (I, J, K)
    assert jnp.allclose(X, X_ref, atol=1e-4, rtol=1e-4)

    print("KERNEL_OK")
</pallas_src>

<mosaic_0001>
module attributes {stable_mosaic.version = 11 : i64} {
  func.func @kernel(%arg0: i32, %arg1: i32, %arg2: memref<8x16xf32, #tpu.memory_space<vmem>>, %arg3: memref<16x16xf32, #tpu.memory_space<vmem>>, %arg4: memref<32x16xf32, #tpu.memory_space<vmem>>, %arg5: memref<8x512xf32, #tpu.memory_space<vmem>>, %arg6: memref<512x16xf32, #tpu.memory_space<vmem>>) attributes {dimension_semantics = [#tpu.dimension_semantics<parallel>, #tpu.dimension_semantics<arbitrary>], iteration_bounds = array<i64: 1, 1>, scalar_prefetch = 0 : i64, scratch_operands = 1 : i64, tpu.core_type = #tpu.core_type<tc>, window_params = [{transform_indices = @transform_0, window_bounds = array<i64: 8, 16>}, {transform_indices = @transform_1, window_bounds = array<i64: 16, 16>}, {pipeline_mode = #tpu.pipeline_mode<synchronous>, transform_indices = @transform_2, window_bounds = array<i64: 32, 16>}, {transform_indices = @transform_3, window_bounds = array<i64: 8, 512>}]} {
    %c0_i32 = arith.constant 0 : i32
    %0 = arith.cmpi eq, %arg1, %c0_i32 : i32
    %1 = arith.extui %0 : i1 to i32
    %c0_i32_0 = arith.constant 0 : i32
    %2 = arith.cmpi ne, %1, %c0_i32_0 : i32
    scf.if %2 {
      %c0_6 = arith.constant 0 : index
      %c0_7 = arith.constant 0 : index
      %7 = vector.load %arg3[%c0_6, %c0_7] : memref<16x16xf32, #tpu.memory_space<vmem>>, vector<16x16xf32>
      %c0_8 = arith.constant 0 : index
      %c0_9 = arith.constant 0 : index
      %8 = vector.load %arg4[%c0_8, %c0_9] : memref<32x16xf32, #tpu.memory_space<vmem>>, vector<32x16xf32>
      %9 = vector.shape_cast %7 : vector<16x16xf32> to vector<16x1x16xf32>
      %10 = vector.shape_cast %8 : vector<32x16xf32> to vector<1x32x16xf32>
      %11 = vector.broadcast %9 : vector<16x1x16xf32> to vector<16x32x16xf32>
      %12 = vector.broadcast %10 : vector<1x32x16xf32> to vector<16x32x16xf32>
      %13 = arith.mulf %11, %12 : vector<16x32x16xf32>
      %14 = vector.shape_cast %13 : vector<16x32x16xf32> to vector<512x16xf32>
      %c0_10 = arith.constant 0 : index
      %c0_11 = arith.constant 0 : index
      %15 = vector.load %arg6[%c0_10, %c0_11] : memref<512x16xf32, #tpu.memory_space<vmem>>, vector<512x16xf32>
      tpu.vector_store %arg6[%c0_10, %c0_11], %14 {strides = array<i32>} : memref<512x16xf32, #tpu.memory_space<vmem>>, vector<512x16xf32>,
    } else {
    }
    %c0 = arith.constant 0 : index
    %c0_1 = arith.constant 0 : index
    %3 = vector.load %arg2[%c0, %c0_1] : memref<8x16xf32, #tpu.memory_space<vmem>>, vector<8x16xf32>
    %c0_2 = arith.constant 0 : index
    %c0_3 = arith.constant 0 : index
    %4 = vector.load %arg6[%c0_2, %c0_3] : memref<512x16xf32, #tpu.memory_space<vmem>>, vector<512x16xf32>
    %cst = arith.constant dense<0.000000e+00> : vector<8x512xf32>
    %5 = tpu.matmul %3, %4, %cst {dimension_numbers = #tpu.dot_dimension_numbers<[1], [1], [0], [0], [0, 0, 1, 0], [], []>} : vector<8x16xf32>, vector<512x16xf32>, vector<8x512xf32> -> vector<8x512xf32>
    %c0_4 = arith.constant 0 : index
    %c0_5 = arith.constant 0 : index
    %6 = vector.load %arg5[%c0_4, %c0_5] : memref<8x512xf32, #tpu.memory_space<vmem>>, vector<8x512xf32>
    tpu.vector_store %arg5[%c0_4, %c0_5], %5 {strides = array<i32>} : memref<8x512xf32, #tpu.memory_space<vmem>>, vector<8x512xf32>,
    return
  }
  func.func @transform_0(%arg0: i32, %arg1: i32) -> (i32, i32) {
    %c0_i32 = arith.constant 0 : i32
    %c0_i32_0 = arith.constant 0 : i32
    return %arg1, %c0_i32 : i32, i32
  }
  func.func @transform_1(%arg0: i32, %arg1: i32) -> (i32, i32) {
    %c0_i32 = arith.constant 0 : i32
    %c0_i32_0 = arith.constant 0 : i32
    return %arg0, %c0_i32 : i32, i32
  }
  func.func @transform_2(%arg0: i32, %arg1: i32) -> (i32, i32) {
    %c0_i32 = arith.constant 0 : i32
    %c0_i32_0 = arith.constant 0 : i32
    %c0_i32_1 = arith.constant 0 : i32
    return %c0_i32, %c0_i32_0 : i32, i32
  }
  func.func @transform_3(%arg0: i32, %arg1: i32) -> (i32, i32) {
    %c0_i32 = arith.constant 0 : i32
    return %arg1, %arg0 : i32, i32
  }
}

</mosaic_0001>

<llo_original>
// kernel: tpu_custom_call.1
$region0: #{tpu_custom_call.1}
  #allocation0 [shape = 'u32[]', space=smem, size = 0x4, offset = 0x4, fixed_abs, tag = 'smem constant byte address 0x4 - core index']
  #allocation1 [shape = 'u32[144,128]{1,0:T(1,128)}', space=vmem, size = 0x12000, scoped, tag = 'internal scratch']
  #allocation2 [shape = 'f32[512,16]{1,0:T(8,128)}', space=vmem, size = 0x40000, scoped, tag = 'scratch operand']
  %s0 = inlined_call_operand.vmem [shape: f32[8,16], index: 0, kind: input, shape index: {}]
  %s1 = inlined_call_operand.vmem [shape: f32[16,16], index: 1, kind: input, shape index: {}]
  %s2 = inlined_call_operand.vmem [shape: f32[32,16], index: 2, kind: input, shape index: {}]
  %s3 = inlined_call_operand.hbm [shape: f32[8,512], index: 3, kind: output, shape index: {}]
  %s4 = sld [smem:[#allocation0]]
  $region26: #{tpu_custom_call.1} parent=0
    _
  %s6 = ssub.s32 1, %s4
  %s7 = scalar_select 0, %s6, %s4
  $region1: #{tpu_custom_call.1} parent=0
    #allocation3 [shape = 'u8[16384]{0}', space=vmem, size = 0x4000, scoped, tag = 'output window, operand 0, single buffered']
    #allocation4 [shape = 's32[1]{0}', space=sflag, size = 0x4, scoped, tag = 'scoped memory for tpu_custom_call.1']
    %8 = vsyncpa [#allocation4], 0
    // Predicated region
    $region2: #{tpu_custom_call.1} parent=1 // pred_check
      _
    $region3: #{tpu_custom_call.1} parent=1 // pred_check_branch
      %10 = sbr.rel (0) target = $region5
    $region4: #{tpu_custom_call.1} parent=1 // pred_region
      _
    $region5: #{tpu_custom_call.1} parent=1 // pred_fallthru
      _
    // Predicated region
    $region6: #{tpu_custom_call.1} parent=1 // pred_check
      _
    $region7: #{tpu_custom_call.1} parent=1 // pred_check_branch
      %12 = sbr.rel (0) target = $region9
    $region8: #{tpu_custom_call.1} parent=1 // pred_region
      _
    $region9: #{tpu_custom_call.1} parent=1 // pred_fallthru
      _
    // Predicated region
    $region10: #{tpu_custom_call.1} parent=1 // pred_check
      _
    $region11: #{tpu_custom_call.1} parent=1 // pred_check_branch
      %14 = sbr.rel (0) target = $region13
    $region12: #{tpu_custom_call.1} parent=1 // pred_region
      _
    $region13: #{tpu_custom_call.1} parent=1 // pred_fallthru
      _
    %p15 = scmp.eq.s32.totalorder 0, 0
    // Predicated region
    $region14: #{tpu_custom_call.1} parent=1 // pred_check
      %p16 = pneg %p15
    $region15: #{tpu_custom_call.1} parent=1 // pred_check_branch
      %18 = sbr.rel (%p16) target = $region17
    $region16: #{tpu_custom_call.1} parent=1 // pred_region
      %v19 = vld [vmem:[%s1] sm:$0xff]
      %v20 = vld [vmem:[%s1 + $0x8] sm:$0xff]
      %v21 = vld [vmem:[%s2] sm:$0xff]
      %v22 = vld [vmem:[%s2 + $0x8] sm:$0xff]
      %v23 = vld [vmem:[%s2 + $0x10] sm:$0xff]
      %v24 = vld [vmem:[%s2 + $0x18] sm:$0xff]
      %v27 = vcombine.high %v19, %v19
      %v29 = vunpack.c.l.s4 1966171168
      %v30 = vunpack.c.0.s8 %v29
      %v31 = vlaneseq
      %v32 = vshrl.u32 %v31, 7
      %v33 = vsub.s32 %v30, %v32
      %v34 = vrot.slane %v19, %v33
      %v36 = vunpack.c.l.s4 1966171168
      %v37 = vunpack.c.0.s8 %v36
      %v38 = vlaneseq
      %v39 = vshrl.u32 %v38, 7
      %v40 = vsub.s32 %v37, %v39
      %v41 = vrot.slane %v27, %v40
      %v42 = vcombine.high %v34, %v34
      %v43 = vcombine.high %v41, %v41
      %v45 = vunpack.c.l.s4 1966171168
      %v46 = vunpack.c.0.s8 %v45
      %v47 = vlaneseq
      %v48 = vshrl.u32 %v47, 7
      %v49 = vsub.s32 %v46, %v48
      %v50 = vrot.slane %v34, %v49
      %v52 = vunpack.c.l.s4 1966171168
      %v53 = vunpack.c.0.s8 %v52
      %v54 = vlaneseq
      %v55 = vshrl.u32 %v54, 7
      %v56 = vsub.s32 %v53, %v55
      %v57 = vrot.slane %v41, %v56
      %v59 = vunpack.c.l.s4 1966171168
      %v60 = vunpack.c.0.s8 %v59
      %v61 = vlaneseq
      %v62 = vshrl.u32 %v61, 7
      %v63 = vsub.s32 %v60, %v62
      %v64 = vrot.slane %v42, %v63
      %v66 = vunpack.c.l.s4 1966171168
      %v67 = vunpack.c.0.s8 %v66
      %v68 = vlaneseq
      %v69 = vshrl.u32 %v68, 7
      %v70 = vsub.s32 %v67, %v69
      %v71 = vrot.slane %v43, %v70
      %v72 = vcombine.high %v50, %v50
      %v73 = vcombine.high %v57, %v57
      %v74 = vcombine.high %v64, %v64
      %v75 = vcombine.high %v71, %v71
      %v76 = vcombine.high %v20, %v20
      %v78 = vunpack.c.l.s4 1966171168
      %v79 = vunpack.c.0.s8 %v78
      %v80 = vlaneseq
      %v81 = vshrl.u32 %v80, 7
      %v82 = vsub.s32 %v79, %v81
      %v83 = vrot.slane %v20, %v82
      %v85 = vunpack.c.l.s4 1966171168
      %v86 = vunpack.c.0.s8 %v85
      %v87 = vlaneseq
      %v88 = vshrl.u32 %v87, 7
      %v89 = vsub.s32 %v86, %v88
      %v90 = vrot.slane %v76, %v89
      %v91 = vcombine.high %v83, %v83
      %v92 = vcombine.high %v90, %v90
      %v94 = vunpack.c.l.s4 1966171168
      %v95 = vunpack.c.0.s8 %v94
      %v96 = vlaneseq
      %v97 = vshrl.u32 %v96, 7
      %v98 = vsub.s32 %v95, %v97
      %v99 = vrot.slane %v83, %v98
      %v101 = vunpack.c.l.s4 1966171168
      %v102 = vunpack.c.0.s8 %v101
      %v103 = vlaneseq
      %v104 = vshrl.u32 %v103, 7
      %v105 = vsub.s32 %v102, %v104
      %v106 = vrot.slane %v90, %v105
      %v108 = vunpack.c.l.s4 1966171168
      %v109 = vunpack.c.0.s8 %v108
      %v110 = vlaneseq
      %v111 = vshrl.u32 %v110, 7
      %v112 = vsub.s32 %v109, %v111
      %v113 = vrot.slane %v91, %v112
      %v115 = vunpack.c.l.s4 1966171168
      %v116 = vunpack.c.0.s8 %v115
      %v117 = vlaneseq
      %v118 = vshrl.u32 %v117, 7
      %v119 = vsub.s32 %v116, %v118
      %v120 = vrot.slane %v92, %v119
      %v121 = vcombine.high %v99, %v99
      %v122 = vcombine.high %v106, %v106
      %v123 = vcombine.high %v113, %v113
      %v124 = vcombine.high %v120, %v120
      %v125 = vlaneseq
      %v126 = vshrl.u32 %v125, 7
      %v127 = vsub.s32 0, %v126
      %v128 = vrot.slane %v50, %v127
      %v129 = vlaneseq
      %v130 = vshrl.u32 %v129, 7
      %v131 = vsub.s32 0, %v130
      %v132 = vrot.slane %v64, %v131
      %v133 = vlaneseq
      %v134 = vshrl.u32 %v133, 7
      %v135 = vsub.s32 0, %v134
      %v136 = vrot.slane %v72, %v135
      %v137 = vlaneseq
      %v138 = vshrl.u32 %v137, 7
      %v139 = vsub.s32 0, %v138
      %v140 = vrot.slane %v74, %v139
      %v141 = vlaneseq
      %v142 = vshrl.u32 %v141, 7
      %v143 = vsub.s32 0, %v142
      %v144 = vrot.slane %v57, %v143
      %v145 = vlaneseq
      %v146 = vshrl.u32 %v145, 7
      %v147 = vsub.s32 0, %v146
      %v148 = vrot.slane %v71, %v147
      %v149 = vlaneseq
      %v150 = vshrl.u32 %v149, 7
      %v151 = vsub.s32 0, %v150
      %v152 = vrot.slane %v73, %v151
      %v153 = vlaneseq
      %v154 = vshrl.u32 %v153, 7
      %v155 = vsub.s32 0, %v154
      %v156 = vrot.slane %v75, %v155
      %v157 = vlaneseq
      %v158 = vshrl.u32 %v157, 7
      %v159 = vsub.s32 0, %v158
      %v160 = vrot.slane %v99, %v159
      %v161 = vlaneseq
      %v162 = vshrl.u32 %v161, 7
      %v163 = vsub.s32 0, %v162
      %v164 = vrot.slane %v113, %v163
      %v165 = vlaneseq
      %v166 = vshrl.u32 %v165, 7
      %v167 = vsub.s32 0, %v166
      %v168 = vrot.slane %v121, %v167
      %v169 = vlaneseq
      %v170 = vshrl.u32 %v169, 7
      %v171 = vsub.s32 0, %v170
      %v172 = vrot.slane %v123, %v171
      %v173 = vlaneseq
      %v174 = vshrl.u32 %v173, 7
      %v175 = vsub.s32 0, %v174
      %v176 = vrot.slane %v106, %v175
      %v177 = vlaneseq
      %v178 = vshrl.u32 %v177, 7
      %v179 = vsub.s32 0, %v178
      %v180 = vrot.slane %v120, %v179
      %v181 = vlaneseq
      %v182 = vshrl.u32 %v181, 7
      %v183 = vsub.s32 0, %v182
      %v184 = vrot.slane %v122, %v183
      %v185 = vlaneseq
      %v186 = vshrl.u32 %v185, 7
      %v187 = vsub.s32 0, %v186
      %v188 = vrot.slane %v124, %v187
      %v205 = vmul.f32 %v128, %v21
      %v206 = vmul.f32 %v128, %v22
      %v207 = vmul.f32 %v128, %v23
      %v208 = vmul.f32 %v128, %v24
      %v209 = vmul.f32 %v132, %v21
      %v210 = vmul.f32 %v132, %v22
      %v211 = vmul.f32 %v132, %v23
      %v212 = vmul.f32 %v132, %v24
      %v213 = vmul.f32 %v136, %v21
      %v214 = vmul.f32 %v136, %v22
      %v215 = vmul.f32 %v136, %v23
      %v216 = vmul.f32 %v136, %v24
      %v217 = vmul.f32 %v140, %v21
      %v218 = vmul.f32 %v140, %v22
      %v219 = vmul.f32 %v140, %v23
      %v220 = vmul.f32 %v140, %v24
      %v221 = vmul.f32 %v144, %v21
      %v222 = vmul.f32 %v144, %v22
      %v223 = vmul.f32 %v144, %v23
      %v224 = vmul.f32 %v144, %v24
      %v225 = vmul.f32 %v148, %v21
      %v226 = vmul.f32 %v148, %v22
      %v227 = vmul.f32 %v148, %v23
      %v228 = vmul.f32 %v148, %v24
      %v229 = vmul.f32 %v152, %v21
      %v230 = vmul.f32 %v152, %v22
      %v231 = vmul.f32 %v152, %v23
      %v232 = vmul.f32 %v152, %v24
      %v233 = vmul.f32 %v156, %v21
      %v234 = vmul.f32 %v156, %v22
      %v235 = vmul.f32 %v156, %v23
      %v236 = vmul.f32 %v156, %v24
      %v237 = vmul.f32 %v160, %v21
      %v238 = vmul.f32 %v160, %v22
      %v239 = vmul.f32 %v160, %v23
      %v240 = vmul.f32 %v160, %v24
      %v241 = vmul.f32 %v164, %v21
      %v242 = vmul.f32 %v164, %v22
      %v243 = vmul.f32 %v164, %v23
      %v244 = vmul.f32 %v164, %v24
      %v245 = vmul.f32 %v168, %v21
      %v246 = vmul.f32 %v168, %v22
      %v247 = vmul.f32 %v168, %v23
      %v248 = vmul.f32 %v168, %v24
      %v249 = vmul.f32 %v172, %v21
      %v250 = vmul.f32 %v172, %v22
      %v251 = vmul.f32 %v172, %v23
      %v252 = vmul.f32 %v172, %v24
      %v253 = vmul.f32 %v176, %v21
      %v254 = vmul.f32 %v176, %v22
      %v255 = vmul.f32 %v176, %v23
      %v256 = vmul.f32 %v176, %v24
      %v257 = vmul.f32 %v180, %v21
      %v258 = vmul.f32 %v180, %v22
      %v259 = vmul.f32 %v180, %v23
      %v260 = vmul.f32 %v180, %v24
      %v261 = vmul.f32 %v184, %v21
      %v262 = vmul.f32 %v184, %v22
      %v263 = vmul.f32 %v184, %v23
      %v264 = vmul.f32 %v184, %v24
      %v265 = vmul.f32 %v188, %v21
      %v266 = vmul.f32 %v188, %v22
      %v267 = vmul.f32 %v188, %v23
      %v268 = vmul.f32 %v188, %v24
      %vm269 = vcmask 130048
      %270 = vst.msk [vmem:[#allocation2] sm:$0xff] %vm269, %v205
      %271 = vst.msk [vmem:[#allocation2 + $0x8] sm:$0xff] %vm269, %v206
      %272 = vst.msk [vmem:[#allocation2 + $0x10] sm:$0xff] %vm269, %v207
      %273 = vst.msk [vmem:[#allocation2 + $0x18] sm:$0xff] %vm269, %v208
      %274 = vst.msk [vmem:[#allocation2 + $0x20] sm:$0xff] %vm269, %v209
      %275 = vst.msk [vmem:[#allocation2 + $0x28] sm:$0xff] %vm269, %v210
      %276 = vst.msk [vmem:[#allocation2 + $0x30] sm:$0xff] %vm269, %v211
      %277 = vst.msk [vmem:[#allocation2 + $0x38] sm:$0xff] %vm269, %v212
      %278 = vst.msk [vmem:[#allocation2 + $0x40] sm:$0xff] %vm269, %v213
      %279 = vst.msk [vmem:[#allocation2 + $0x48] sm:$0xff] %vm269, %v214
      %280 = vst.msk [vmem:[#allocation2 + $0x50] sm:$0xff] %vm269, %v215
      %281 = vst.msk [vmem:[#allocation2 + $0x58] sm:$0xff] %vm269, %v216
      %282 = vst.msk [vmem:[#allocation2 + $0x60] sm:$0xff] %vm269, %v217
      %283 = vst.msk [vmem:[#allocation2 + $0x68] sm:$0xff] %vm269, %v218
      %284 = vst.msk [vmem:[#allocation2 + $0x70] sm:$0xff] %vm269, %v219
      %285 = vst.msk [vmem:[#allocation2 + $0x78] sm:$0xff] %vm269, %v220
      %286 = vst.msk [vmem:[#allocation2 + $0x80] sm:$0xff] %vm269, %v221
      %287 = vst.msk [vmem:[#allocation2 + $0x88] sm:$0xff] %vm269, %v222
      %288 = vst.msk [vmem:[#allocation2 + $0x90] sm:$0xff] %vm269, %v223
      %289 = vst.msk [vmem:[#allocation2 + $0x98] sm:$0xff] %vm269, %v224
      %290 = vst.msk [vmem:[#allocation2 + $0xa0] sm:$0xff] %vm269, %v225
      %291 = vst.msk [vmem:[#allocation2 + $0xa8] sm:$0xff] %vm269, %v226
      %292 = vst.msk [vmem:[#allocation2 + $0xb0] sm:$0xff] %vm269, %v227
      %293 = vst.msk [vmem:[#allocation2 + $0xb8] sm:$0xff] %vm269, %v228
      %294 = vst.msk [vmem:[#allocation2 + $0xc0] sm:$0xff] %vm269, %v229
      %295 = vst.msk [vmem:[#allocation2 + $0xc8] sm:$0xff] %vm269, %v230
      %296 = vst.msk [vmem:[#allocation2 + $0xd0] sm:$0xff] %vm269, %v231
      %297 = vst.msk [vmem:[#allocation2 + $0xd8] sm:$0xff] %vm269, %v232
      %298 = vst.msk [vmem:[#allocation2 + $0xe0] sm:$0xff] %vm269, %v233
      %299 = vst.msk [vmem:[#allocation2 + $0xe8] sm:$0xff] %vm269, %v234
      %300 = vst.msk [vmem:[#allocation2 + $0xf0] sm:$0xff] %vm269, %v235
      %301 = vst.msk [vmem:[#allocation2 + $0xf8] sm:$0xff] %vm269, %v236
      %302 = vst.msk [vmem:[#allocation2 + $0x100] sm:$0xff] %vm269, %v237
      %303 = vst.msk [vmem:[#allocation2 + $0x108] sm:$0xff] %vm269, %v238
      %304 = vst.msk [vmem:[#allocation2 + $0x110] sm:$0xff] %vm269, %v239
      %305 = vst.msk [vmem:[#allocation2 + $0x118] sm:$0xff] %vm269, %v240
      %306 = vst.msk [vmem:[#allocation2 + $0x120] sm:$0xff] %vm269, %v241
      %307 = vst.msk [vmem:[#allocation2 + $0x128] sm:$0xff] %vm269, %v242
      %308 = vst.msk [vmem:[#allocation2 + $0x130] sm:$0xff] %vm269, %v243
      %309 = vst.msk [vmem:[#allocation2 + $0x138] sm:$0xff] %vm269, %v244
      %310 = vst.msk [vmem:[#allocation2 + $0x140] sm:$0xff] %vm269, %v245
      %311 = vst.msk [vmem:[#allocation2 + $0x148] sm:$0xff] %vm269, %v246
      %312 = vst.msk [vmem:[#allocation2 + $0x150] sm:$0xff] %vm269, %v247
      %313 = vst.msk [vmem:[#allocation2 + $0x158] sm:$0xff] %vm269, %v248
      %314 = vst.msk [vmem:[#allocation2 + $0x160] sm:$0xff] %vm269, %v249
      %315 = vst.msk [vmem:[#allocation2 + $0x168] sm:$0xff] %vm269, %v250
      %316 = vst.msk [vmem:[#allocation2 + $0x170] sm:$0xff] %vm269, %v251
      %317 = vst.msk [vmem:[#allocation2 + $0x178] sm:$0xff] %vm269, %v252
      %318 = vst.msk [vmem:[#allocation2 + $0x180] sm:$0xff] %vm269, %v253
      %319 = vst.msk [vmem:[#allocation2 + $0x188] sm:$0xff] %vm269, %v254
      %320 = vst.msk [vmem:[#allocation2 + $0x190] sm:$0xff] %vm269, %v255
      %321 = vst.msk [vmem:[#allocation2 + $0x198] sm:$0xff] %vm269, %v256
      %322 = vst.msk [vmem:[#allocation2 + $0x1a0] sm:$0xff] %vm269, %v257
      %323 = vst.msk [vmem:[#allocation2 + $0x1a8] sm:$0xff] %vm269, %v258
      %324 = vst.msk [vmem:[#allocation2 + $0x1b0] sm:$0xff] %vm269, %v259
      %325 = vst.msk [vmem:[#allocation2 + $0x1b8] sm:$0xff] %vm269, %v260
      %326 = vst.msk [vmem:[#allocation2 + $0x1c0] sm:$0xff] %vm269, %v261
      %327 = vst.msk [vmem:[#allocation2 + $0x1c8] sm:$0xff] %vm269, %v262
      %328 = vst.msk [vmem:[#allocation2 + $0x1d0] sm:$0xff] %vm269, %v263
      %329 = vst.msk [vmem:[#allocation2 + $0x1d8] sm:$0xff] %vm269, %v264
      %330 = vst.msk [vmem:[#allocation2 + $0x1e0] sm:$0xff] %vm269, %v265
      %331 = vst.msk [vmem:[#allocation2 + $0x1e8] sm:$0xff] %vm269, %v266
      %332 = vst.msk [vmem:[#allocation2 + $0x1f0] sm:$0xff] %vm269, %v267
      %333 = vst.msk [vmem:[#allocation2 + $0x1f8] sm:$0xff] %vm269, %v268
    $region17: #{tpu_custom_call.1} parent=1 // pred_fallthru
      _
    %v334 = vld [vmem:[%s0] sm:$0xff]
    %v335 = vld [vmem:[#allocation2] sm:$0xff]
    %v336 = vld [vmem:[#allocation2 + $0x8] sm:$0xff]
    %v337 = vld [vmem:[#allocation2 + $0x10] sm:$0xff]
    %v338 = vld [vmem:[#allocation2 + $0x18] sm:$0xff]
    %v339 = vld [vmem:[#allocation2 + $0x20] sm:$0xff]
    %v340 = vld [vmem:[#allocation2 + $0x28] sm:$0xff]
    %v341 = vld [vmem:[#allocation2 + $0x30] sm:$0xff]
    %v342 = vld [vmem:[#allocation2 + $0x38] sm:$0xff]
    %v343 = vld [vmem:[#allocation2 + $0x40] sm:$0xff]
    %v344 = vld [vmem:[#allocation2 + $0x48] sm:$0xff]
    %v345 = vld [vmem:[#allocation2 + $0x50] sm:$0xff]
    %v346 = vld [vmem:[#allocation2 + $0x58] sm:$0xff]
    %v347 = vld [vmem:[#allocation2 + $0x60] sm:$0xff]
    %v348 = vld [vmem:[#allocation2 + $0x68] sm:$0xff]
    %v349 = vld [vmem:[#allocation2 + $0x70] sm:$0xff]
    %v350 = vld [vmem:[#allocation2 + $0x78] sm:$0xff]
    %v351 = vld [vmem:[#allocation2 + $0x80] sm:$0xff]
    %v352 = vld [vmem:[#allocation2 + $0x88] sm:$0xff]
    %v353 = vld [vmem:[#allocation2 + $0x90] sm:$0xff]
    %v354 = vld [vmem:[#allocation2 + $0x98] sm:$0xff]
    %v355 = vld [vmem:[#allocation2 + $0xa0] sm:$0xff]
    %v356 = vld [vmem:[#allocation2 + $0xa8] sm:$0xff]
    %v357 = vld [vmem:[#allocation2 + $0xb0] sm:$0xff]
    %v358 = vld [vmem:[#allocation2 + $0xb8] sm:$0xff]
    %v359 = vld [vmem:[#allocation2 + $0xc0] sm:$0xff]
    %v360 = vld [vmem:[#allocation2 + $0xc8] sm:$0xff]
    %v361 = vld [vmem:[#allocation2 + $0xd0] sm:$0xff]
    %v362 = vld [vmem:[#allocation2 + $0xd8] sm:$0xff]
    %v363 = vld [vmem:[#allocation2 + $0xe0] sm:$0xff]
    %v364 = vld [vmem:[#allocation2 + $0xe8] sm:$0xff]
    %v365 = vld [vmem:[#allocation2 + $0xf0] sm:$0xff]
    %v366 = vld [vmem:[#allocation2 + $0xf8] sm:$0xff]
    %v367 = vld [vmem:[#allocation2 + $0x100] sm:$0xff]
    %v368 = vld [vmem:[#allocation2 + $0x108] sm:$0xff]
    %v369 = vld [vmem:[#allocation2 + $0x110] sm:$0xff]
    %v370 = vld [vmem:[#allocation2 + $0x118] sm:$0xff]
    %v371 = vld [vmem:[#allocation2 + $0x120] sm:$0xff]
    %v372 = vld [vmem:[#allocation2 + $0x128] sm:$0xff]
    %v373 = vld [vmem:[#allocation2 + $0x130] sm:$0xff]
    %v374 = vld [vmem:[#allocation2 + $0x138] sm:$0xff]
    %v375 = vld [vmem:[#allocation2 + $0x140] sm:$0xff]
    %v376 = vld [vmem:[#allocation2 + $0x148] sm:$0xff]
    %v377 = vld [vmem:[#allocation2 + $0x150] sm:$0xff]
    %v378 = vld [vmem:[#allocation2 + $0x158] sm:$0xff]
    %v379 = vld [vmem:[#allocation2 + $0x160] sm:$0xff]
    %v380 = vld [vmem:[#allocation2 + $0x168] sm:$0xff]
    %v381 = vld [vmem:[#allocation2 + $0x170] sm:$0xff]
    %v382 = vld [vmem:[#allocation2 + $0x178] sm:$0xff]
    %v383 = vld [vmem:[#allocation2 + $0x180] sm:$0xff]
    %v384 = vld [vmem:[#allocation2 + $0x188] sm:$0xff]
    %v385 = vld [vmem:[#allocation2 + $0x190] sm:$0xff]
    %v386 = vld [vmem:[#allocation2 + $0x198] sm:$0xff]
    %v387 = vld [vmem:[#allocation2 + $0x1a0] sm:$0xff]
    %v388 = vld [vmem:[#allocation2 + $0x1a8] sm:$0xff]
    %v389 = vld [vmem:[#allocation2 + $0x1b0] sm:$0xff]
    %v390 = vld [vmem:[#allocation2 + $0x1b8] sm:$0xff]
    %v391 = vld [vmem:[#allocation2 + $0x1c0] sm:$0xff]
    %v392 = vld [vmem:[#allocation2 + $0x1c8] sm:$0xff]
    %v393 = vld [vmem:[#allocation2 + $0x1d0] sm:$0xff]
    %v394 = vld [vmem:[#allocation2 + $0x1d8] sm:$0xff]
    %v395 = vld [vmem:[#allocation2 + $0x1e0] sm:$0xff]
    %v396 = vld [vmem:[#allocation2 + $0x1e8] sm:$0xff]
    %v397 = vld [vmem:[#allocation2 + $0x1f0] sm:$0xff]
    %v398 = vld [vmem:[#allocation2 + $0x1f8] sm:$0xff]
    %vm399 = vcmask 130048
    %v401 = vsel %vm399, %v334, 0
    %v404 = vsel %vm399, %v335, 0
    %v407 = vsel %vm399, %v336, 0
    %v410 = vsel %vm399, %v337, 0
    %v413 = vsel %vm399, %v338, 0
    %v416 = vsel %vm399, %v339, 0
    %v419 = vsel %vm399, %v340, 0
    %v422 = vsel %vm399, %v341, 0
    %v425 = vsel %vm399, %v342, 0
    %v428 = vsel %vm399, %v343, 0
    %v431 = vsel %vm399, %v344, 0
    %v434 = vsel %vm399, %v345, 0
    %v437 = vsel %vm399, %v346, 0
    %v440 = vsel %vm399, %v347, 0
    %v443 = vsel %vm399, %v348, 0
    %v446 = vsel %vm399, %v349, 0
    %v449 = vsel %vm399, %v350, 0
    %v452 = vsel %vm399, %v351, 0
    %v455 = vsel %vm399, %v352, 0
    %v458 = vsel %vm399, %v353, 0
    %v461 = vsel %vm399, %v354, 0
    %v464 = vsel %vm399, %v355, 0
    %v467 = vsel %vm399, %v356, 0
    %v470 = vsel %vm399, %v357, 0
    %v473 = vsel %vm399, %v358, 0
    %v476 = vsel %vm399, %v359, 0
    %v479 = vsel %vm399, %v360, 0
    %v482 = vsel %vm399, %v361, 0
    %v485 = vsel %vm399, %v362, 0
    %v488 = vsel %vm399, %v363, 0
    %v491 = vsel %vm399, %v364, 0
    %v494 = vsel %vm399, %v365, 0
    %v497 = vsel %vm399, %v366, 0
    %v500 = vsel %vm399, %v367, 0
    %v503 = vsel %vm399, %v368, 0
    %v506 = vsel %vm399, %v369, 0
    %v509 = vsel %vm399, %v370, 0
    %v512 = vsel %vm399, %v371, 0
    %v515 = vsel %vm399, %v372, 0
    %v518 = vsel %vm399, %v373, 0
    %v521 = vsel %vm399, %v374, 0
    %v524 = vsel %vm399, %v375, 0
    %v527 = vsel %vm399, %v376, 0
    %v530 = vsel %vm399, %v377, 0
    %v533 = vsel %vm399, %v378, 0
    %v536 = vsel %vm399, %v379, 0
    %v539 = vsel %vm399, %v380, 0
    %v542 = vsel %vm399, %v381, 0
    %v545 = vsel %vm399, %v382, 0
    %v548 = vsel %vm399, %v383, 0
    %v551 = vsel %vm399, %v384, 0
    %v554 = vsel %vm399, %v385, 0
    %v557 = vsel %vm399, %v386, 0
    %v560 = vsel %vm399, %v387, 0
    %v563 = vsel %vm399, %v388, 0
    %v566 = vsel %vm399, %v389, 0
    %v569 = vsel %vm399, %v390, 0
    %v572 = vsel %vm399, %v391, 0
    %v575 = vsel %vm399, %v392, 0
    %v578 = vsel %vm399, %v393, 0
    %v581 = vsel %vm399, %v394, 0
    %v584 = vsel %vm399, %v395, 0
    %v587 = vsel %vm399, %v396, 0
    %v590 = vsel %vm399, %v397, 0
    %v593 = vsel %vm399, %v398, 0
    %595 = vmatprep.subr.mxu0 0.0
    %596 = vmatpush1.xpose.msra.mxu0 %v404
    %597 = vmatprep.subr.mxu0 0.0
    %598 = vmatpush1.xpose.msra.mxu0 %v407
    %599 = vmatprep.subr.mxu0 0.0
    %600 = vmatpush1.xpose.msra.mxu0 %v410
    %601 = vmatprep.subr.mxu0 0.0
    %602 = vmatpush1.xpose.msra.mxu0 %v413
    %603 = vmatprep.subr.mxu0 0.0
    %604 = vmatpush1.xpose.msra.mxu0 %v416
    %605 = vmatprep.subr.mxu0 0.0
    %606 = vmatpush1.xpose.msra.mxu0 %v419
    %607 = vmatprep.subr.mxu0 0.0
    %608 = vmatpush1.xpose.msra.mxu0 %v422
    %609 = vmatprep.subr.mxu0 0.0
    %610 = vmatpush1.xpose.msra.mxu0 %v425
    %611 = vmatprep.subr.mxu0 0.0
    %612 = vmatpush1.xpose.msra.mxu0 %v428
    %613 = vmatprep.subr.mxu0 0.0
    %614 = vmatpush1.xpose.msra.mxu0 %v431
    %615 = vmatprep.subr.mxu0 0.0
    %616 = vmatpush1.xpose.msra.mxu0 %v434
    %617 = vmatprep.subr.mxu0 0.0
    %618 = vmatpush1.xpose.msra.mxu0 %v437
    %619 = vmatprep.subr.mxu0 0.0
    %620 = vmatpush1.xpose.msra.mxu0 %v440
    %621 = vmatprep.subr.mxu0 0.0
    %622 = vmatpush1.xpose.msra.mxu0 %v443
    %623 = vmatprep.subr.mxu0 0.0
    %624 = vmatpush1.xpose.msra.mxu0 %v446
    %625 = vmatprep.subr.mxu0 0.0
    %626 = vmatpush1.xpose.msra.mxu0 %v449
    %627 = vmatprep.subr.mxu0 0.0
    %628 = vmatpush1.xpose.msra.mxu0 %v452
    %629 = vmatprep.subr.mxu0 0.0
    %630 = vmatpush1.xpose.msra.mxu0 %v455
    %631 = vmatprep.subr.mxu0 0.0
    %632 = vmatpush1.xpose.msra.mxu0 %v458
    %633 = vmatprep.subr.mxu0 0.0
    %634 = vmatpush1.xpose.msra.mxu0 %v461
    %635 = vmatprep.subr.mxu0 0.0
    %636 = vmatpush1.xpose.msra.mxu0 %v464
    %637 = vmatprep.subr.mxu0 0.0
    %638 = vmatpush1.xpose.msra.mxu0 %v467
    %639 = vmatprep.subr.mxu0 0.0
    %640 = vmatpush1.xpose.msra.mxu0 %v470
    %641 = vmatprep.subr.mxu0 0.0
    %642 = vmatpush1.xpose.msra.mxu0 %v473
    %643 = vmatprep.subr.mxu0 0.0
    %644 = vmatpush1.xpose.msra.mxu0 %v476
    %645 = vmatprep.subr.mxu0 0.0
    %646 = vmatpush1.xpose.msra.mxu0 %v479
    %647 = vmatprep.subr.mxu0 0.0
    %648 = vmatpush1.xpose.msra.mxu0 %v482
    %649 = vmatprep.subr.mxu0 0.0
    %650 = vmatpush1.xpose.msra.mxu0 %v485
    %651 = vmatprep.subr.mxu0 0.0
    %652 = vmatpush1.xpose.msra.mxu0 %v488
    %653 = vmatprep.subr.mxu0 0.0
    %654 = vmatpush1.xpose.msra.mxu0 %v491
    %655 = vmatprep.subr.mxu0 0.0
    %656 = vmatpush1.xpose.msra.mxu0 %v494
    %657 = vmatprep.subr.mxu0 0.0
    %658 = vmatpush1.xpose.msra.mxu0 %v497
    %659 = vmatprep.mubr.f32.mxu0 0.0
    %660 = vmatmul.mubr.f32.gmra.mrb[0].mxu0 %v401
    %v661 = vpop.f32.mrb[0].mxu0
    %v662 = vadd.f32 0.0, %v661
    %v663 = vpop.f32.mrb[0].mxu0
    %v664 = vadd.f32 0.0, %v663
    %665 = vdwg.mxu0
    %666 = vmatprep.subr.mxu0 0.0
    %667 = vmatpush1.xpose.msra.mxu0 %v500
    %668 = vmatprep.subr.mxu0 0.0
    %669 = vmatpush1.xpose.msra.mxu0 %v503
    %670 = vmatprep.subr.mxu0 0.0
    %671 = vmatpush1.xpose.msra.mxu0 %v506
    %672 = vmatprep.subr.mxu0 0.0
    %673 = vmatpush1.xpose.msra.mxu0 %v509
    %674 = vmatprep.subr.mxu0 0.0
    %675 = vmatpush1.xpose.msra.mxu0 %v512
    %676 = vmatprep.subr.mxu0 0.0
    %677 = vmatpush1.xpose.msra.mxu0 %v515
    %678 = vmatprep.subr.mxu0 0.0
    %679 = vmatpush1.xpose.msra.mxu0 %v518
    %680 = vmatprep.subr.mxu0 0.0
    %681 = vmatpush1.xpose.msra.mxu0 %v521
    %682 = vmatprep.subr.mxu0 0.0
    %683 = vmatpush1.xpose.msra.mxu0 %v524
    %684 = vmatprep.subr.mxu0 0.0
    %685 = vmatpush1.xpose.msra.mxu0 %v527
    %686 = vmatprep.subr.mxu0 0.0
    %687 = vmatpush1.xpose.msra.mxu0 %v530
    %688 = vmatprep.subr.mxu0 0.0
    %689 = vmatpush1.xpose.msra.mxu0 %v533
    %690 = vmatprep.subr.mxu0 0.0
    %691 = vmatpush1.xpose.msra.mxu0 %v536
    %692 = vmatprep.subr.mxu0 0.0
    %693 = vmatpush1.xpose.msra.mxu0 %v539
    %694 = vmatprep.subr.mxu0 0.0
    %695 = vmatpush1.xpose.msra.mxu0 %v542
    %696 = vmatprep.subr.mxu0 0.0
    %697 = vmatpush1.xpose.msra.mxu0 %v545
    %698 = vmatprep.subr.mxu0 0.0
    %699 = vmatpush1.xpose.msra.mxu0 %v548
    %700 = vmatprep.subr.mxu0 0.0
    %701 = vmatpush1.xpose.msra.mxu0 %v551
    %702 = vmatprep.subr.mxu0 0.0
    %703 = vmatpush1.xpose.msra.mxu0 %v554
    %704 = vmatprep.subr.mxu0 0.0
    %705 = vmatpush1.xpose.msra.mxu0 %v557
    %706 = vmatprep.subr.mxu0 0.0
    %707 = vmatpush1.xpose.msra.mxu0 %v560
    %708 = vmatprep.subr.mxu0 0.0
    %709 = vmatpush1.xpose.msra.mxu0 %v563
    %710 = vmatprep.subr.mxu0 0.0
    %711 = vmatpush1.xpose.msra.mxu0 %v566
    %712 = vmatprep.subr.mxu0 0.0
    %713 = vmatpush1.xpose.msra.mxu0 %v569
    %714 = vmatprep.subr.mxu0 0.0
    %715 = vmatpush1.xpose.msra.mxu0 %v572
    %716 = vmatprep.subr.mxu0 0.0
    %717 = vmatpush1.xpose.msra.mxu0 %v575
    %718 = vmatprep.subr.mxu0 0.0
    %719 = vmatpush1.xpose.msra.mxu0 %v578
    %720 = vmatprep.subr.mxu0 0.0
    %721 = vmatpush1.xpose.msra.mxu0 %v581
    %722 = vmatprep.subr.mxu0 0.0
    %723 = vmatpush1.xpose.msra.mxu0 %v584
    %724 = vmatprep.subr.mxu0 0.0
    %725 = vmatpush1.xpose.msra.mxu0 %v587
    %726 = vmatprep.subr.mxu0 0.0
    %727 = vmatpush1.xpose.msra.mxu0 %v590
    %728 = vmatprep.subr.mxu0 0.0
    %729 = vmatpush1.xpose.msra.mxu0 %v593
    %730 = vmatprep.mubr.f32.mxu0 0.0
    %731 = vmatmul.mubr.f32.gmra.mrb[0].mxu0 %v401
    %v732 = vpop.f32.mrb[0].mxu0
    %v733 = vadd.f32 0.0, %v732
    %v734 = vpop.f32.mrb[0].mxu0
    %v735 = vadd.f32 0.0, %v734
    %736 = vdwg.mxu0
    %737 = vst [vmem:[#allocation3] sm:$0xff] %v662
    %738 = vst [vmem:[#allocation3 + $0x8] sm:$0xff] %v664
    %739 = vst [vmem:[#allocation3 + $0x10] sm:$0xff] %v733
    %740 = vst [vmem:[#allocation3 + $0x18] sm:$0xff] %v735
    // Predicated region
    $region18: #{tpu_custom_call.1} parent=1 // pred_check
      _
    $region19: #{tpu_custom_call.1} parent=1 // pred_check_branch
      %742 = sbr.rel (0) target = $region21
    $region20: #{tpu_custom_call.1} parent=1 // pred_region
      %s744 = ssub.s32 512, 512
      %745 = vsyncadd [#allocation4], %s744
      %s747 = sshll.u32 [#allocation3], 4
      %s748 = int_to_ptr.vmem [resolvable:$true] %s747
      %750 = dma.vmem_to_hbm [thread:$0]  %s748, 512, %s3, [#allocation4]
    $region21: #{tpu_custom_call.1} parent=1 // pred_fallthru
      _
    // Predicated region
    $region22: #{tpu_custom_call.1} parent=1 // pred_check
      _
    $region23: #{tpu_custom_call.1} parent=1 // pred_check_branch
      %752 = sbr.rel (0) target = $region25
    $region24: #{tpu_custom_call.1} parent=1 // pred_region
      %753 = dma.done [#allocation4], 512
    $region25: #{tpu_custom_call.1} parent=1 // pred_fallthru
      _
    %754 = vsyncpa [#allocation4], 1

</llo_original>
